<compile_context>
chip_gen: v5e
topology: v5e:2x2
jax: 0.10.0
libtpu: 0.0.40
codegen_flags: <defaults>
</compile_context>

<pallas_src>
import jax
import jax.numpy as jnp
import numpy as np
from jax.experimental import pallas as pl
from jax.experimental.pallas import tpu as pltpu

_LANE = 128
_SUBLANE = 8
# ~2 MiB of f32 per array per block.
_TARGET_BLOCK_ELEMS = 512 * 1024

_HAS_INKERNEL_RNG = hasattr(pltpu, "prng_seed") and hasattr(pltpu, "stateful_normal")


def ddpm_schedules(betas: jnp.ndarray):
    """Pre-computed schedules for DDPM (JAX version of the reference)."""
    alphas = 1.0 - betas
    alphas_cumprod = jnp.cumprod(alphas, axis=-1)
    return {
        "alphas": alphas,
        "betas": betas,
        "alphas_cumprod": alphas_cumprod,
        "sqrt_alphas_cumprod": jnp.sqrt(alphas_cumprod),
        "sqrt_one_minus_alphas_cumprod": jnp.sqrt(1.0 - alphas_cumprod),
    }


# ---------------------------------------------------------------------------
# Lane-dense flatten / tiling helpers
# ---------------------------------------------------------------------------

def _round_up(x: int, m: int) -> int:
    return ((x + m - 1) // m) * m


def _tiling(n_elems: int):
    """Pick (rows_padded, row_tile) for a (rows, 128) lane-dense reshape."""
    rows = _round_up(n_elems, _LANE) // _LANE
    target_rows = max(_SUBLANE, (_TARGET_BLOCK_ELEMS // _LANE) // _SUBLANE * _SUBLANE)
    row_tile = min(target_rows, _round_up(rows, _SUBLANE))
    rows_padded = _round_up(rows, row_tile)
    return rows_padded, row_tile


def _flatten_pad(x, rows_padded: int):
    """(B, ...) -> lane-dense (B, rows_padded, 128).  Free if no padding needed."""
    b = x.shape[0]
    flat = x.reshape(b, -1)
    n = flat.shape[1]
    n_pad = rows_padded * _LANE
    if n_pad != n:
        flat = jnp.pad(flat, ((0, 0), (0, n_pad - n)))
    return flat.reshape(b, rows_padded, _LANE)


def _unflatten(y, shape):
    b = shape[0]
    n = int(np.prod(shape[1:]))
    return y.reshape(b, -1)[:, :n].reshape(shape)


# ---------------------------------------------------------------------------
# Kernels
# ---------------------------------------------------------------------------

def _blend_kernel(a_ref, s_ref, x_ref, noise_ref, out_ref):
    """x_t = a[b] * x + s[b] * noise   (a/s are per-batch SMEM scalars)."""
    b = pl.program_id(0)
    a = a_ref[b]
    s = s_ref[b]
    out_ref[...] = (a * x_ref[...] + s * noise_ref[...]).astype(out_ref.dtype)


def _blend_rng_kernel(seed_ref, a_ref, s_ref, x_ref, xt_ref, noise_ref):
    """Fused: draw noise in-kernel, emit (x_t, noise).  Saves one HBM pass."""
    b = pl.program_id(0)
    j = pl.program_id(1)
    # Independent stream per (batch, spatial-tile) so both grid axes stay
    # freely parallel (megacore-safe on v7x).
    pltpu.prng_seed(seed_ref[0], b, j)
    noise = pltpu.stateful_normal(x_ref.shape, jnp.float32)
    a = a_ref[b]
    s = s_ref[b]
    xt_ref[...] = (a * x_ref[...] + s * noise).astype(xt_ref.dtype)
    noise_ref[...] = noise.astype(noise_ref.dtype)


# ---------------------------------------------------------------------------
# Wrappers
# ---------------------------------------------------------------------------

def apply_noise_pallas(x, noise, ts, sqrt_alphas_cumprod, sqrt_one_minus_alphas_cumprod):
    """x_t = sqrt_ac[ts] * x + sqrt_om[ts] * noise, broadcast over (C, H, W)."""
    orig_shape = x.shape
    B = orig_shape[0]
    n = int(np.prod(orig_shape[1:]))
    rows_padded, row_tile = _tiling(n)

    xp = _flatten_pad(x, rows_padded)
    npad = _flatten_pad(noise, rows_padded)

    # Gather the per-batch schedule coefficients once in the wrapper (tiny).
    a = jnp.take(sqrt_alphas_cumprod, ts).astype(jnp.float32)
    s = jnp.take(sqrt_one_minus_alphas_cumprod, ts).astype(jnp.float32)

    spec = pl.BlockSpec((1, row_tile, _LANE), lambda b, j, a, s: (b, j, 0))
    out = pl.pallas_call(
        _blend_kernel,
        out_shape=jax.ShapeDtypeStruct((B, rows_padded, _LANE), x.dtype),
        grid_spec=pltpu.PrefetchScalarGridSpec(
            num_scalar_prefetch=2,            # a, s -> SMEM
            grid=(B, rows_padded // row_tile),
            in_specs=[spec, spec],
            out_specs=spec,
        ),
        compiler_params=pltpu.CompilerParams(
            dimension_semantics=("parallel", "parallel")),
    )(a, s, xp, npad)
    return _unflatten(out, orig_shape)


def apply_noise_rng_pallas(x, ts, seed, sqrt_alphas_cumprod, sqrt_one_minus_alphas_cumprod):
    """Fused training path: generate noise in-kernel, return (x_t, noise)."""
    orig_shape = x.shape
    B = orig_shape[0]
    n = int(np.prod(orig_shape[1:]))
    rows_padded, row_tile = _tiling(n)

    xp = _flatten_pad(x, rows_padded)

    a = jnp.take(sqrt_alphas_cumprod, ts).astype(jnp.float32)
    s = jnp.take(sqrt_one_minus_alphas_cumprod, ts).astype(jnp.float32)

    spec = pl.BlockSpec((1, row_tile, _LANE), lambda b, j, seed, a, s: (b, j, 0))
    xt, noise = pl.pallas_call(
        _blend_rng_kernel,
        out_shape=(
            jax.ShapeDtypeStruct((B, rows_padded, _LANE), x.dtype),
            jax.ShapeDtypeStruct((B, rows_padded, _LANE), x.dtype),
        ),
        grid_spec=pltpu.PrefetchScalarGridSpec(
            num_scalar_prefetch=3,            # seed, a, s -> SMEM
            grid=(B, rows_padded // row_tile),
            in_specs=[spec],
            out_specs=(spec, spec),
        ),
        compiler_params=pltpu.CompilerParams(
            dimension_semantics=("parallel", "parallel")),
    )(seed, a, s, xp)
    return _unflatten(xt, orig_shape), _unflatten(noise, orig_shape)


# ---------------------------------------------------------------------------
# Module
# ---------------------------------------------------------------------------

class ForwardDiffusionProcess:
    """JAX/Pallas port of the PyTorch ForwardDiffusionProcess module."""

    def __init__(self, schedules):
        self.schedules = schedules
        self.sqrt_alphas_cumprod = schedules["sqrt_alphas_cumprod"].astype(jnp.float32)
        self.sqrt_one_minus_alphas_cumprod = schedules[
            "sqrt_one_minus_alphas_cumprod"
        ].astype(jnp.float32)
        self.n_T = int(schedules["alphas"].shape[0])

    def apply_noise(self, x, noise, ts):
        return apply_noise_pallas(
            x, noise, ts,
            self.sqrt_alphas_cumprod,
            self.sqrt_one_minus_alphas_cumprod,
        )

    def forward(self, x, key):
        """Training-mode forward: sample t and noise randomly (deterministic via key)."""
        k_ts, k_noise = jax.random.split(key)
        _ts = jax.random.randint(k_ts, (x.shape[0],), 0, self.n_T, dtype=jnp.int32)

        if _HAS_INKERNEL_RNG:
            try:
                seed = jax.random.randint(
                    k_noise, (1,), 0, jnp.iinfo(jnp.int32).max, dtype=jnp.int32)
                x_t, noise = apply_noise_rng_pallas(
                    x, _ts, seed,
                    self.sqrt_alphas_cumprod,
                    self.sqrt_one_minus_alphas_cumprod,
                )
                return (x_t, noise, _ts)
            except Exception:
                # Older jax without the stateful PRNG kernel API: fall back to
                # host-side RNG + the (still lane-dense, tiled) unfused kernel.
                pass

        noise = jax.random.normal(k_noise, x.shape, dtype=x.dtype)
        x_t = self.apply_noise(x, noise, _ts)
        return (x_t, noise, _ts)

    __call__ = forward


if __name__ == "__main__":
    key = jax.random.PRNGKey(0)
    k_x, k_fwd, k_noise2 = jax.random.split(key, 3)

    # Small, deterministic setup.
    B, C, H, W = 2, 4, 16, 16
    n_T = 8
    betas = jnp.linspace(1e-4, 0.02, n_T, dtype=jnp.float32)
    sched = ddpm_schedules(betas)

    fdp = ForwardDiffusionProcess(sched)
    x = jax.random.normal(k_x, (B, C, H, W), dtype=jnp.float32)

    # Training-style forward (fused in-kernel RNG when available).
    x_t, noise, ts = fdp(x, k_fwd)
    jax.block_until_ready(x_t)
    jax.block_until_ready(noise)

    assert x_t.shape == (B, C, H, W)
    assert noise.shape == (B, C, H, W)
    assert ts.shape == (B,)

    a = sched["sqrt_alphas_cumprod"][ts].reshape(B, 1, 1, 1)
    b = sched["sqrt_one_minus_alphas_cumprod"][ts].reshape(B, 1, 1, 1)
    ref = a * x + b * noise
    assert jnp.allclose(x_t, ref, atol=1e-5, rtol=1e-5), "forward() mismatch"

    # Explicit apply_noise path with externally supplied noise (unfused kernel).
    noise2 = jax.random.normal(k_noise2, (B, C, H, W), dtype=jnp.float32)
    ts2 = jnp.array([0, n_T - 1], dtype=jnp.int32)
    x_t2 = fdp.apply_noise(x, noise2, ts2)
    jax.block_until_ready(x_t2)
    a2 = sched["sqrt_alphas_cumprod"][ts2].reshape(B, 1, 1, 1)
    b2 = sched["sqrt_one_minus_alphas_cumprod"][ts2].reshape(B, 1, 1, 1)
    ref2 = a2 * x + b2 * noise2
    assert jnp.allclose(x_t2, ref2, atol=1e-6, rtol=1e-6), "apply_noise() mismatch"

    print("KERNEL_OK")
</pallas_src>

<mosaic_0001>
module attributes {stable_mosaic.version = 11 : i64} {
  func.func @_blend_rng_kernel(%arg0: i32, %arg1: i32, %arg2: memref<1xi32, #tpu.memory_space<smem>>, %arg3: memref<2xf32, #tpu.memory_space<smem>>, %arg4: memref<2xf32, #tpu.memory_space<smem>>, %arg5: memref<1x8x128xf32, #tpu.memory_space<vmem>>, %arg6: memref<1x8x128xf32, #tpu.memory_space<vmem>>, %arg7: memref<1x8x128xf32, #tpu.memory_space<vmem>>) attributes {dimension_semantics = [#tpu.dimension_semantics<parallel>, #tpu.dimension_semantics<parallel>], iteration_bounds = array<i64: 2, 1>, scalar_prefetch = 3 : i64, scratch_operands = 0 : i64, tpu.core_type = #tpu.core_type<tc>, window_params = [{transform_indices = @transform_0, window_bounds = array<i64: 1, 8, 128>}, {transform_indices = @transform_1, window_bounds = array<i64: 1, 8, 128>}, {transform_indices = @transform_2, window_bounds = array<i64: 1, 8, 128>}]} {
    %c0 = arith.constant 0 : index
    %0 = memref.load %arg2[%c0] : memref<1xi32, #tpu.memory_space<smem>>
    "tpu.prng_set_seed_32"(%0, %arg0, %arg1) : (i32, i32, i32) -> ()
    %c0_i32 = arith.constant 0 : i32
    %c0_i32_0 = arith.constant 0 : i32
    %cst = arith.constant -0.99999994 : f32
    %cst_1 = arith.constant 1.000000e+00 : f32
    %1 = vector.broadcast %cst : f32 to vector<1x1x1xf32>
    %2 = vector.broadcast %cst_1 : f32 to vector<1x1x1xf32>
    %3 = "tpu.prng_random_bits"() : () -> vector<1x8x128xi32>
    %c9_i32 = arith.constant 9 : i32
    %4 = vector.broadcast %c9_i32 : i32 to vector<1x8x128xi32>
    %5 = arith.shrui %3, %4 : vector<1x8x128xi32>
    %c1065353216_i32 = arith.constant 1065353216 : i32
    %6 = vector.broadcast %c1065353216_i32 : i32 to vector<1x8x128xi32>
    %7 = arith.ori %5, %6 : vector<1x8x128xi32>
    %8 = tpu.bitcast %7 : vector<1x8x128xi32> -> vector<1x8x128xf32>
    %cst_2 = arith.constant 1.000000e+00 : f32
    %9 = vector.broadcast %cst_2 : f32 to vector<1x8x128xf32>
    %10 = arith.subf %8, %9 : vector<1x8x128xf32>
    %11 = arith.subf %2, %1 : vector<1x1x1xf32>
    %12 = vector.broadcast %11 : vector<1x1x1xf32> to vector<1x8x128xf32>
    %13 = arith.mulf %10, %12 : vector<1x8x128xf32>
    %14 = vector.broadcast %1 : vector<1x1x1xf32> to vector<1x8x128xf32>
    %15 = arith.addf %13, %14 : vector<1x8x128xf32>
    %16 = vector.broadcast %1 : vector<1x1x1xf32> to vector<1x8x128xf32>
    %17 = arith.maximumf %16, %15 : vector<1x8x128xf32>
    %cst_3 = arith.constant 0.000000e+00 : f32
    %18 = vector.broadcast %cst_3 : f32 to vector<1x8x128xf32>
    %19 = arith.subf %18, %17 : vector<1x8x128xf32>
    %20 = arith.mulf %17, %19 : vector<1x8x128xf32>
    %21 = math.log1p %20 : vector<1x8x128xf32>
    %cst_4 = arith.constant 0.000000e+00 : f32
    %22 = vector.broadcast %cst_4 : f32 to vector<1x8x128xf32>
    %23 = arith.subf %22, %21 : vector<1x8x128xf32>
    %cst_5 = arith.constant 5.000000e+00 : f32
    %24 = vector.broadcast %cst_5 : f32 to vector<1x8x128xf32>
    %25 = arith.cmpf olt, %23, %24 : vector<1x8x128xf32>
    %cst_6 = arith.constant 2.500000e+00 : f32
    %26 = vector.broadcast %cst_6 : f32 to vector<1x8x128xf32>
    %27 = arith.subf %23, %26 : vector<1x8x128xf32>
    %28 = math.sqrt %23 : vector<1x8x128xf32>
    %cst_7 = arith.constant 3.000000e+00 : f32
    %29 = vector.broadcast %cst_7 : f32 to vector<1x8x128xf32>
    %30 = arith.subf %28, %29 : vector<1x8x128xf32>
    %31 = arith.select %25, %27, %30 : vector<1x8x128xi1>, vector<1x8x128xf32>
    %cst_8 = arith.constant 2.81022636E-8 : f32
    %cst_9 = arith.constant -2.00214257E-4 : f32
    %32 = vector.broadcast %cst_8 : f32 to vector<1x8x128xf32>
    %33 = vector.broadcast %cst_9 : f32 to vector<1x8x128xf32>
    %34 = arith.select %25, %32, %33 : vector<1x8x128xi1>, vector<1x8x128xf32>
    %cst_10 = arith.constant 3.43273939E-7 : f32
    %cst_11 = arith.constant 1.00950558E-4 : f32
    %35 = vector.broadcast %cst_10 : f32 to vector<1x8x128xf32>
    %36 = vector.broadcast %cst_11 : f32 to vector<1x8x128xf32>
    %37 = arith.select %25, %35, %36 : vector<1x8x128xi1>, vector<1x8x128xf32>
    %38 = arith.mulf %34, %31 : vector<1x8x128xf32>
    %39 = arith.addf %37, %38 : vector<1x8x128xf32>
    %cst_12 = arith.constant -3.5233877E-6 : f32
    %cst_13 = arith.constant 0.00134934322 : f32
    %40 = vector.broadcast %cst_12 : f32 to vector<1x8x128xf32>
    %41 = vector.broadcast %cst_13 : f32 to vector<1x8x128xf32>
    %42 = arith.select %25, %40, %41 : vector<1x8x128xi1>, vector<1x8x128xf32>
    %43 = arith.mulf %39, %31 : vector<1x8x128xf32>
    %44 = arith.addf %42, %43 : vector<1x8x128xf32>
    %cst_14 = arith.constant -4.39150654E-6 : f32
    %cst_15 = arith.constant -0.00367342844 : f32
    %45 = vector.broadcast %cst_14 : f32 to vector<1x8x128xf32>
    %46 = vector.broadcast %cst_15 : f32 to vector<1x8x128xf32>
    %47 = arith.select %25, %45, %46 : vector<1x8x128xi1>, vector<1x8x128xf32>
    %48 = arith.mulf %44, %31 : vector<1x8x128xf32>
    %49 = arith.addf %47, %48 : vector<1x8x128xf32>
    %cst_16 = arith.constant 2.1858087E-4 : f32
    %cst_17 = arith.constant 0.00573950773 : f32
    %50 = vector.broadcast %cst_16 : f32 to vector<1x8x128xf32>
    %51 = vector.broadcast %cst_17 : f32 to vector<1x8x128xf32>
    %52 = arith.select %25, %50, %51 : vector<1x8x128xi1>, vector<1x8x128xf32>
    %53 = arith.mulf %49, %31 : vector<1x8x128xf32>
    %54 = arith.addf %52, %53 : vector<1x8x128xf32>
    %cst_18 = arith.constant -0.00125372503 : f32
    %cst_19 = arith.constant -0.0076224613 : f32
    %55 = vector.broadcast %cst_18 : f32 to vector<1x8x128xf32>
    %56 = vector.broadcast %cst_19 : f32 to vector<1x8x128xf32>
    %57 = arith.select %25, %55, %56 : vector<1x8x128xi1>, vector<1x8x128xf32>
    %58 = arith.mulf %54, %31 : vector<1x8x128xf32>
    %59 = arith.addf %57, %58 : vector<1x8x128xf32>
    %cst_20 = arith.constant -0.00417768164 : f32
    %cst_21 = arith.constant 0.00943887047 : f32
    %60 = vector.broadcast %cst_20 : f32 to vector<1x8x128xf32>
    %61 = vector.broadcast %cst_21 : f32 to vector<1x8x128xf32>
    %62 = arith.select %25, %60, %61 : vector<1x8x128xi1>, vector<1x8x128xf32>
    %63 = arith.mulf %59, %31 : vector<1x8x128xf32>
    %64 = arith.addf %62, %63 : vector<1x8x128xf32>
    %cst_22 = arith.constant 0.246640727 : f32
    %cst_23 = arith.constant 1.00167406 : f32
    %65 = vector.broadcast %cst_22 : f32 to vector<1x8x128xf32>
    %66 = vector.broadcast %cst_23 : f32 to vector<1x8x128xf32>
    %67 = arith.select %25, %65, %66 : vector<1x8x128xi1>, vector<1x8x128xf32>
    %68 = arith.mulf %64, %31 : vector<1x8x128xf32>
    %69 = arith.addf %67, %68 : vector<1x8x128xf32>
    %cst_24 = arith.constant 1.50140941 : f32
    %cst_25 = arith.constant 2.83297682 : f32
    %70 = vector.broadcast %cst_24 : f32 to vector<1x8x128xf32>
    %71 = vector.broadcast %cst_25 : f32 to vector<1x8x128xf32>
    %72 = arith.select %25, %70, %71 : vector<1x8x128xi1>, vector<1x8x128xf32>
    %73 = arith.mulf %69, %31 : vector<1x8x128xf32>
    %74 = arith.addf %72, %73 : vector<1x8x128xf32>
    %75 = math.absf %17 : vector<1x8x128xf32>
    %cst_26 = arith.constant 1.000000e+00 : f32
    %76 = vector.broadcast %cst_26 : f32 to vector<1x8x128xf32>
    %77 = arith.cmpf oeq, %75, %76 : vector<1x8x128xf32>
    %cst_27 = arith.constant 0x7F800000 : f32
    %78 = vector.broadcast %cst_27 : f32 to vector<1x8x128xf32>
    %79 = arith.mulf %78, %17 : vector<1x8x128xf32>
    %80 = arith.mulf %74, %17 : vector<1x8x128xf32>
    %81 = arith.select %77, %79, %80 : vector<1x8x128xi1>, vector<1x8x128xf32>
    %cst_28 = arith.constant 1.41421354 : f32
    %82 = vector.broadcast %cst_28 : f32 to vector<1x8x128xf32>
    %83 = arith.mulf %82, %81 : vector<1x8x128xf32>
    %84 = arith.index_cast %arg0 : i32 to index
    %85 = memref.load %arg3[%84] : memref<2xf32, #tpu.memory_space<smem>>
    %86 = arith.index_cast %arg0 : i32 to index
    %87 = memref.load %arg4[%86] : memref<2xf32, #tpu.memory_space<smem>>
    %c0_29 = arith.constant 0 : index
    %c0_30 = arith.constant 0 : index
    %c0_31 = arith.constant 0 : index
    %88 = vector.load %arg5[%c0_29, %c0_30, %c0_31] : memref<1x8x128xf32, #tpu.memory_space<vmem>>, vector<1x8x128xf32>
    %89 = vector.broadcast %85 : f32 to vector<1x8x128xf32>
    %90 = arith.mulf %89, %88 : vector<1x8x128xf32>
    %91 = vector.broadcast %87 : f32 to vector<1x8x128xf32>
    %92 = arith.mulf %91, %83 : vector<1x8x128xf32>
    %93 = arith.addf %90, %92 : vector<1x8x128xf32>
    %c0_32 = arith.constant 0 : index
    %c0_33 = arith.constant 0 : index
    %c0_34 = arith.constant 0 : index
    %94 = vector.load %arg6[%c0_32, %c0_33, %c0_34] : memref<1x8x128xf32, #tpu.memory_space<vmem>>, vector<1x8x128xf32>
    tpu.vector_store %arg6[%c0_32, %c0_33, %c0_34], %93 {strides = array<i32>} : memref<1x8x128xf32, #tpu.memory_space<vmem>>, vector<1x8x128xf32>,
    %c0_35 = arith.constant 0 : index
    %c0_36 = arith.constant 0 : index
    %c0_37 = arith.constant 0 : index
    %95 = vector.load %arg7[%c0_35, %c0_36, %c0_37] : memref<1x8x128xf32, #tpu.memory_space<vmem>>, vector<1x8x128xf32>
    tpu.vector_store %arg7[%c0_35, %c0_36, %c0_37], %83 {strides = array<i32>} : memref<1x8x128xf32, #tpu.memory_space<vmem>>, vector<1x8x128xf32>,
    return
  }
  func.func @transform_0(%arg0: i32, %arg1: i32, %arg2: memref<1xi32, #tpu.memory_space<smem>>, %arg3: memref<2xf32, #tpu.memory_space<smem>>, %arg4: memref<2xf32, #tpu.memory_space<smem>>) -> (i32, i32, i32) {
    %c0_i32 = arith.constant 0 : i32
    %c0_i32_0 = arith.constant 0 : i32
    return %arg0, %arg1, %c0_i32 : i32, i32, i32
  }
  func.func @transform_1(%arg0: i32, %arg1: i32, %arg2: memref<1xi32, #tpu.memory_space<smem>>, %arg3: memref<2xf32, #tpu.memory_space<smem>>, %arg4: memref<2xf32, #tpu.memory_space<smem>>) -> (i32, i32, i32) {
    %c0_i32 = arith.constant 0 : i32
    %c0_i32_0 = arith.constant 0 : i32
    return %arg0, %arg1, %c0_i32 : i32, i32, i32
  }
  func.func @transform_2(%arg0: i32, %arg1: i32, %arg2: memref<1xi32, #tpu.memory_space<smem>>, %arg3: memref<2xf32, #tpu.memory_space<smem>>, %arg4: memref<2xf32, #tpu.memory_space<smem>>) -> (i32, i32, i32) {
    %c0_i32 = arith.constant 0 : i32
    %c0_i32_0 = arith.constant 0 : i32
    return %arg0, %arg1, %c0_i32 : i32, i32, i32
  }
}

module attributes {stable_mosaic.version = 11 : i64} {
  func.func @_blend_kernel(%arg0: i32, %arg1: i32, %arg2: memref<2xf32, #tpu.memory_space<smem>>, %arg3: memref<2xf32, #tpu.memory_space<smem>>, %arg4: memref<1x8x128xf32, #tpu.memory_space<vmem>>, %arg5: memref<1x8x128xf32, #tpu.memory_space<vmem>>, %arg6: memref<1x8x128xf32, #tpu.memory_space<vmem>>) attributes {dimension_semantics = [#tpu.dimension_semantics<parallel>, #tpu.dimension_semantics<parallel>], iteration_bounds = array<i64: 2, 1>, scalar_prefetch = 2 : i64, scratch_operands = 0 : i64, tpu.core_type = #tpu.core_type<tc>, window_params = [{transform_indices = @transform_0, window_bounds = array<i64: 1, 8, 128>}, {transform_indices = @transform_1, window_bounds = array<i64: 1, 8, 128>}, {transform_indices = @transform_2, window_bounds = array<i64: 1, 8, 128>}]} {
    %0 = arith.index_cast %arg0 : i32 to index
    %1 = memref.load %arg2[%0] : memref<2xf32, #tpu.memory_space<smem>>
    %2 = arith.index_cast %arg0 : i32 to index
    %3 = memref.load %arg3[%2] : memref<2xf32, #tpu.memory_space<smem>>
    %c0 = arith.constant 0 : index
    %c0_0 = arith.constant 0 : index
    %c0_1 = arith.constant 0 : index
    %4 = vector.load %arg4[%c0, %c0_0, %c0_1] : memref<1x8x128xf32, #tpu.memory_space<vmem>>, vector<1x8x128xf32>
    %5 = vector.broadcast %1 : f32 to vector<1x8x128xf32>
    %6 = arith.mulf %5, %4 : vector<1x8x128xf32>
    %c0_2 = arith.constant 0 : index
    %c0_3 = arith.constant 0 : index
    %c0_4 = arith.constant 0 : index
    %7 = vector.load %arg5[%c0_2, %c0_3, %c0_4] : memref<1x8x128xf32, #tpu.memory_space<vmem>>, vector<1x8x128xf32>
    %8 = vector.broadcast %3 : f32 to vector<1x8x128xf32>
    %9 = arith.mulf %8, %7 : vector<1x8x128xf32>
    %10 = arith.addf %6, %9 : vector<1x8x128xf32>
    %c0_5 = arith.constant 0 : index
    %c0_6 = arith.constant 0 : index
    %c0_7 = arith.constant 0 : index
    %11 = vector.load %arg6[%c0_5, %c0_6, %c0_7] : memref<1x8x128xf32, #tpu.memory_space<vmem>>, vector<1x8x128xf32>
    tpu.vector_store %arg6[%c0_5, %c0_6, %c0_7], %10 {strides = array<i32>} : memref<1x8x128xf32, #tpu.memory_space<vmem>>, vector<1x8x128xf32>,
    return
  }
  func.func @transform_0(%arg0: i32, %arg1: i32, %arg2: memref<2xf32, #tpu.memory_space<smem>>, %arg3: memref<2xf32, #tpu.memory_space<smem>>) -> (i32, i32, i32) {
    %c0_i32 = arith.constant 0 : i32
    %c0_i32_0 = arith.constant 0 : i32
    return %arg0, %arg1, %c0_i32 : i32, i32, i32
  }
  func.func @transform_1(%arg0: i32, %arg1: i32, %arg2: memref<2xf32, #tpu.memory_space<smem>>, %arg3: memref<2xf32, #tpu.memory_space<smem>>) -> (i32, i32, i32) {
    %c0_i32 = arith.constant 0 : i32
    %c0_i32_0 = arith.constant 0 : i32
    return %arg0, %arg1, %c0_i32 : i32, i32, i32
  }
  func.func @transform_2(%arg0: i32, %arg1: i32, %arg2: memref<2xf32, #tpu.memory_space<smem>>, %arg3: memref<2xf32, #tpu.memory_space<smem>>) -> (i32, i32, i32) {
    %c0_i32 = arith.constant 0 : i32
    %c0_i32_0 = arith.constant 0 : i32
    return %arg0, %arg1, %c0_i32 : i32, i32, i32
  }
}

</mosaic_0001>

<llo_original>
// kernel: tpu_custom_call.1
$region0: #{tpu_custom_call.1}
  #allocation0 [shape = 'u32[]', space=smem, size = 0x4, offset = 0x4, fixed_abs, tag = 'smem constant byte address 0x4 - core index']
  #allocation1 [shape = 'u32[72,128]{1,0:T(1,128)}', space=vmem, size = 0x9000, scoped, tag = 'internal scratch']
  #allocation2 [shape = 's32[1]{0}', space=sflag, size = 0x4, scoped, tag = 'scoped memory for tpu_custom_call.1']
  #allocation3 [shape = 'u8[512]{0}', space=smem, size = 0x200, scoped, tag = 'prefetched SMEM operand 0']
  #allocation4 [shape = 'u8[512]{0}', space=smem, size = 0x200, scoped, tag = 'prefetched SMEM operand 1']
  %s0 = inlined_call_operand.hbm [shape: f32[2], index: 0, kind: input, shape index: {}]
  %s1 = inlined_call_operand.hbm [shape: f32[2], index: 1, kind: input, shape index: {}]
  %s2 = inlined_call_operand.hbm [shape: f32[2,8,128], index: 2, kind: input, shape index: {}]
  %s3 = inlined_call_operand.hbm [shape: f32[2,8,128], index: 3, kind: input, shape index: {}]
  %s4 = inlined_call_operand.hbm [shape: f32[2,8,128], index: 4, kind: output, shape index: {}]
  %s5 = sld [smem:[#allocation0]]
  $region49: #{tpu_custom_call.1} parent=0
    _
  %s7 = ssub.s32 1, %s5
  %s8 = scalar_select 0, %s7, %s5
  %s10 = sshll.u32 %s0, 4
  %s11 = int_to_ptr.hbm [resolvable:$true] %s10
  %13 = dma.hbm_to_smem %s11, 16, [#allocation3], [#allocation2]
  %s15 = sshll.u32 %s1, 4
  %s16 = int_to_ptr.hbm [resolvable:$true] %s15
  %18 = dma.hbm_to_smem %s16, 16, [#allocation4], [#allocation2]
  %20 = dma.done [#allocation2], 32
  %21 = sfence
  $region1: #{tpu_custom_call.1} parent=0
    #allocation5 [shape = 'u8[8192]{0}', space=vmem, size = 0x2000, scoped, tag = 'input window, operand 2']
    #allocation6 [shape = 's32[2]{0}', space=sflag, size = 0x8, scoped, tag = 'scoped memory for tpu_custom_call.1']
    #allocation7 [shape = 's32[2]{0}', space=sflag, size = 0x8, scoped, tag = 'scoped memory for tpu_custom_call.1']
    #allocation8 [shape = 'u8[8192]{0}', space=vmem, size = 0x2000, scoped, tag = 'input window, operand 3']
    #allocation9 [shape = 's32[2]{0}', space=sflag, size = 0x8, scoped, tag = 'scoped memory for tpu_custom_call.1']
    #allocation10 [shape = 'u8[8192]{0}', space=vmem, size = 0x2000, scoped, tag = 'output window, operand 0']
    %22 = vsyncpa [#allocation6], 0
    %s23 = scalar_lea.sflag [#allocation6], 1
    %24 = vsyncpa %s23, 0
    %25 = vsyncpa [#allocation9], 0
    %s26 = scalar_lea.sflag [#allocation9], 1
    %27 = vsyncpa %s26, 0
    %28 = vsyncpa [#allocation7], 0
    %s29 = scalar_lea.sflag [#allocation7], 1
    %30 = vsyncpa %s29, 0
    loop: start=0, step=1, limit=4
    $region2: #{tpu_custom_call.1} parent=1 // loop_pre_header
      _
    $region3: #{tpu_custom_call.1} parent=1 // loop_header
      %s32 = sphi 0, %s36
      %p33 = scmp.ge.s32.totalorder %s32, 4
      %s39 = sphi 0, %s51
      %s40 = sphi 0, %s47
      %s41 = sphi 0, %s39
      %s42 = sphi 0, %s40
      %s43 = sphi 0, %s41
      %s44 = sphi 0, %s42
      %s56 = sphi 0, %s58
      %s59 = sphi 0, %s56
      %s60 = sphi 0, %s59
      %s76 = sphi 0, %s60
      %s84 = sphi 0, %s86
      %s87 = sphi 0, %s84
      %s88 = sphi 0, %s87
      %s104 = sphi 0, %s88
      %s112 = sphi 0, %s114
      %s115 = sphi 0, %s112
      %s116 = sphi 0, %s115
      %s132 = sphi 0, %s116
    $region4: #{tpu_custom_call.1} parent=1 // loop_header_branch
      %35 = sbr.rel (%p33) target = $region8
    $region5: #{tpu_custom_call.1} parent=1 // loop_body
      %s37 = ssub.s32 %s32, 1
      %s38 = ssub.s32 %s32, 2
      %s45 = sadd.s32 1, %s40
      %p46 = scmp.ge.s32.totalorder %s45, 1
      %s47 = scalar_select %p46, 0, %s45
      %s48 = sadd.s32 1, %s39
      %s49 = scalar_select %p46, %s48, %s39
      %p50 = scmp.ge.s32.totalorder %s49, 2
      %s51 = scalar_select %p50, 0, %s49
      %s52 = ssub.s32 %s39, %s51
      %s53 = ssub.s32 %s40, %s47
      %s54 = sor.u32 %s52, %s53
      %p55 = scmp.eq.s32.totalorder %s54, 0
      %s57 = sadd.s32 %s56, 1
      %s58 = scalar_select %p55, %s56, %s57
      %p61 = pneg %p55
      %p62 = scmp.eq.s32.totalorder %s32, 1
      %p63 = por %p61, %p62
      %p64 = scmp.ne.s32.totalorder %s56, %s59
      %p65 = scmp.eq.s32.totalorder %s32, 0
      %p66 = por %p64, %p65
      %p67 = scmp.ne.s32.totalorder %s56, %s59
      %p68 = scmp.eq.s32.totalorder %s37, 1
      %p69 = por %p67, %p68
      %p70 = scmp.ne.s32.totalorder %s59, %s60
      %p71 = scmp.eq.s32.totalorder %s37, 0
      %p72 = por %p70, %p71
      %p73 = scmp.ne.s32.totalorder %s59, %s60
      %p74 = scmp.eq.s32.totalorder %s38, 1
      %p75 = por %p73, %p74
      %p77 = scmp.ne.s32.totalorder %s60, %s76
      %p78 = scmp.eq.s32.totalorder %s38, 0
      %p79 = por %p77, %p78
      %s80 = ssub.s32 %s39, %s51
      %s81 = ssub.s32 %s40, %s47
      %s82 = sor.u32 %s80, %s81
      %p83 = scmp.eq.s32.totalorder %s82, 0
      %s85 = sadd.s32 %s84, 1
      %s86 = scalar_select %p83, %s84, %s85
      %p89 = pneg %p83
      %p90 = scmp.eq.s32.totalorder %s32, 1
      %p91 = por %p89, %p90
      %p92 = scmp.ne.s32.totalorder %s84, %s87
      %p93 = scmp.eq.s32.totalorder %s32, 0
      %p94 = por %p92, %p93
      %p95 = scmp.ne.s32.totalorder %s84, %s87
      %p96 = scmp.eq.s32.totalorder %s37, 1
      %p97 = por %p95, %p96
      %p98 = scmp.ne.s32.totalorder %s87, %s88
      %p99 = scmp.eq.s32.totalorder %s37, 0
      %p100 = por %p98, %p99
      %p101 = scmp.ne.s32.totalorder %s87, %s88
      %p102 = scmp.eq.s32.totalorder %s38, 1
      %p103 = por %p101, %p102
      %p105 = scmp.ne.s32.totalorder %s88, %s104
      %p106 = scmp.eq.s32.totalorder %s38, 0
      %p107 = por %p105, %p106
      %s108 = ssub.s32 %s39, %s51
      %s109 = ssub.s32 %s40, %s47
      %s110 = sor.u32 %s108, %s109
      %p111 = scmp.eq.s32.totalorder %s110, 0
      %s113 = sadd.s32 %s112, 1
      %s114 = scalar_select %p111, %s112, %s113
      %p117 = pneg %p111
      %p118 = scmp.eq.s32.totalorder %s32, 1
      %p119 = por %p117, %p118
      %p120 = scmp.ne.s32.totalorder %s112, %s115
      %p121 = scmp.eq.s32.totalorder %s32, 0
      %p122 = por %p120, %p121
      %p123 = scmp.ne.s32.totalorder %s112, %s115
      %p124 = scmp.eq.s32.totalorder %s37, 1
      %p125 = por %p123, %p124
      %p126 = scmp.ne.s32.totalorder %s115, %s116
      %p127 = scmp.eq.s32.totalorder %s37, 0
      %p128 = por %p126, %p127
      %p129 = scmp.ne.s32.totalorder %s115, %s116
      %p130 = scmp.eq.s32.totalorder %s38, 1
      %p131 = por %p129, %p130
      %p133 = scmp.ne.s32.totalorder %s116, %s132
      %p134 = scmp.eq.s32.totalorder %s38, 0
      %p135 = por %p133, %p134
      %p136 = scmp.le.s32.totalorder 1, %s32
      %p137 = scmp.lt.s32.totalorder %s32, 3
      %p138 = pnand %p136, %p137
      %p139 = pneg %p138
      // Predicated region
      $region9: #{tpu_custom_call.1} parent=5 // pred_check
        _
      $region10: #{tpu_custom_call.1} parent=5 // pred_check_branch
        %141 = sbr.rel (%p138) target = $region12
      $region11: #{tpu_custom_call.1} parent=5 // pred_region
        %s142 = ssub.s32 %s32, 1
      $region12: #{tpu_custom_call.1} parent=5 // pred_fallthru
        _
      %p143 = scmp.lt.s32.totalorder %s32, 2
      // Predicated region
      $region13: #{tpu_custom_call.1} parent=5 // pred_check
        %p144 = pneg %p143
      $region14: #{tpu_custom_call.1} parent=5 // pred_check_branch
        %146 = sbr.rel (%p144) target = $region16
      $region15: #{tpu_custom_call.1} parent=5 // pred_region
        // Predicated region
        $region17: #{tpu_custom_call.1} parent=15 // pred_check
          %p147 = pneg %p66
        $region18: #{tpu_custom_call.1} parent=15 // pred_check_branch
          %149 = sbr.rel (%p147) target = $region20
        $region19: #{tpu_custom_call.1} parent=15 // pred_region
          %s150 = sand.u32 %s56, 1
          %s151 = scalar_lea.sflag [#allocation6], %s150
          %s152 = sand.u32 %s56, 1
          %s153 = smul.addr %s152, 8
          %s154 = scalar_lea.vmem [#allocation5], %s153
          %156 = vsyncadd %s151, 0
          %s157 = sadd.s32 %s40, %s39
          %s158 = smul.addr %s157, 8
          %s159 = scalar_lea.hbm %s2, %s158
          %s161 = sshll.u32 %s159, 4
          %s162 = int_to_ptr.hbm [resolvable:$true] %s161
          %s163 = sshll.u32 %s154, 4
          %s164 = int_to_ptr.vmem [resolvable:$true] %s163
          %166 = dma.hbm_to_vmem [thread:$0]  %s162, 128, %s164, %s151
        $region20: #{tpu_custom_call.1} parent=15 // pred_fallthru
          _
        // Predicated region
        $region21: #{tpu_custom_call.1} parent=15 // pred_check
          %p167 = pneg %p94
        $region22: #{tpu_custom_call.1} parent=15 // pred_check_branch
          %169 = sbr.rel (%p167) target = $region24
        $region23: #{tpu_custom_call.1} parent=15 // pred_region
          %s170 = sand.u32 %s84, 1
          %s171 = scalar_lea.sflag [#allocation9], %s170
          %s172 = sand.u32 %s84, 1
          %s173 = smul.addr %s172, 8
          %s174 = scalar_lea.vmem [#allocation8], %s173
          %176 = vsyncadd %s171, 0
          %s177 = sadd.s32 %s40, %s39
          %s178 = smul.addr %s177, 8
          %s179 = scalar_lea.hbm %s3, %s178
          %s181 = sshll.u32 %s179, 4
          %s182 = int_to_ptr.hbm [resolvable:$true] %s181
          %s183 = sshll.u32 %s174, 4
          %s184 = int_to_ptr.vmem [resolvable:$true] %s183
          %186 = dma.hbm_to_vmem [thread:$0]  %s182, 128, %s184, %s171
        $region24: #{tpu_custom_call.1} parent=15 // pred_fallthru
          _
      $region16: #{tpu_custom_call.1} parent=5 // pred_fallthru
        _
      %p187 = scmp.le.s32.totalorder 1, %s32
      %p188 = scmp.lt.s32.totalorder %s32, 3
      %p189 = pnand %p187, %p188
      %p190 = pneg %p189
      // Predicated region
      $region25: #{tpu_custom_call.1} parent=5 // pred_check
        _
      $region26: #{tpu_custom_call.1} parent=5 // pred_check_branch
        %192 = sbr.rel (%p189) target = $region28
      $region27: #{tpu_custom_call.1} parent=5 // pred_region
        %s193 = ssub.s32 %s32, 1
        %s194 = sand.u32 %s59, 1
        %s195 = scalar_lea.sflag [#allocation6], %s194
        %s196 = sand.u32 %s59, 1
        %s197 = smul.addr %s196, 8
        %s198 = scalar_lea.vmem [#allocation5], %s197
        // Predicated region
        $region29: #{tpu_custom_call.1} parent=27 // pred_check
          %p199 = pneg %p72
        $region30: #{tpu_custom_call.1} parent=27 // pred_check_branch
          %201 = sbr.rel (%p199) target = $region32
        $region31: #{tpu_custom_call.1} parent=27 // pred_region
          %203 = dma.done %s195, 128
        $region32: #{tpu_custom_call.1} parent=27 // pred_fallthru
          _
        %s204 = sand.u32 %s87, 1
        %s205 = scalar_lea.sflag [#allocation9], %s204
        %s206 = sand.u32 %s87, 1
        %s207 = smul.addr %s206, 8
        %s208 = scalar_lea.vmem [#allocation8], %s207
        // Predicated region
        $region33: #{tpu_custom_call.1} parent=27 // pred_check
          %p209 = pneg %p100
        $region34: #{tpu_custom_call.1} parent=27 // pred_check_branch
          %211 = sbr.rel (%p209) target = $region36
        $region35: #{tpu_custom_call.1} parent=27 // pred_region
          %213 = dma.done %s205, 128
        $region36: #{tpu_custom_call.1} parent=27 // pred_fallthru
          _
        %s214 = sand.u32 %s59, 1
        %s215 = scalar_lea.sflag [#allocation6], %s214
        %s216 = sand.u32 %s59, 1
        %s217 = smul.addr %s216, 8
        %s218 = scalar_lea.vmem [#allocation5], %s217
        %p219 = pneg %p72
        %p220 = pneg %p69
        %s221 = sand.u32 %s87, 1
        %s222 = scalar_lea.sflag [#allocation9], %s221
        %s223 = sand.u32 %s87, 1
        %s224 = smul.addr %s223, 8
        %s225 = scalar_lea.vmem [#allocation8], %s224
        %p226 = pneg %p100
        %p227 = pneg %p97
        %p228 = pneg %p128
        %p229 = pneg %p125
        %s230 = sand.u32 %s115, 1
        %s231 = scalar_lea.sflag [#allocation7], %s230
        %s232 = sand.u32 %s115, 1
        %s233 = smul.addr %s232, 8
        %s234 = scalar_lea.vmem [#allocation10], %s233
        %s235 = sld [smem:[#allocation3 + %s41]]
        %s236 = sld [smem:[#allocation4 + %s41]]
        %v237 = vld [vmem:[%s198] sm:$0xff]
        %v238 = vstv %s235
        %v239 = vmul.f32 %v238, %v237
        %v240 = vld [vmem:[%s208] sm:$0xff]
        %v241 = vstv %s236
        %v242 = vmul.f32 %v241, %v240
        %v243 = vadd.f32 %v239, %v242
        %244 = vst [vmem:[%s234] sm:$0xff] %v243
        %s245 = sand.u32 %s115, 1
        %s246 = scalar_lea.sflag [#allocation7], %s245
        %s247 = sand.u32 %s115, 1
        %s248 = smul.addr %s247, 8
        %s249 = scalar_lea.vmem [#allocation10], %s248
        // Predicated region
        $region37: #{tpu_custom_call.1} parent=27 // pred_check
          %p250 = pneg %p125
        $region38: #{tpu_custom_call.1} parent=27 // pred_check_branch
          %252 = sbr.rel (%p250) target = $region40
        $region39: #{tpu_custom_call.1} parent=27 // pred_region
          %254 = vsyncadd %s246, 0
          %s255 = sadd.s32 %s42, %s41
          %s256 = smul.addr %s255, 8
          %s257 = scalar_lea.hbm %s4, %s256
          %s259 = sshll.u32 %s249, 4
          %s260 = int_to_ptr.vmem [resolvable:$true] %s259
          %s261 = sshll.u32 %s257, 4
          %s262 = int_to_ptr.hbm [resolvable:$true] %s261
          %264 = dma.vmem_to_hbm [thread:$0]  %s260, 128, %s262, %s246
        $region40: #{tpu_custom_call.1} parent=27 // pred_fallthru
          _
      $region28: #{tpu_custom_call.1} parent=5 // pred_fallthru
        _
      %p265 = scmp.le.s32.totalorder 2, %s32
      // Predicated region
      $region41: #{tpu_custom_call.1} parent=5 // pred_check
        %p266 = pneg %p265
      $region42: #{tpu_custom_call.1} parent=5 // pred_check_branch
        %268 = sbr.rel (%p266) target = $region44
      $region43: #{tpu_custom_call.1} parent=5 // pred_region
        %s269 = ssub.s32 %s32, 2
        // Predicated region
        $region45: #{tpu_custom_call.1} parent=43 // pred_check
          %p270 = pneg %p131
        $region46: #{tpu_custom_call.1} parent=43 // pred_check_branch
          %272 = sbr.rel (%p270) target = $region48
        $region47: #{tpu_custom_call.1} parent=43 // pred_region
          %s273 = sand.u32 %s116, 1
          %s274 = scalar_lea.sflag [#allocation7], %s273
          %s275 = sand.u32 %s116, 1
          %s276 = smul.addr %s275, 8
          %s277 = scalar_lea.vmem [#allocation10], %s276
          %279 = dma.done %s274, 128
        $region48: #{tpu_custom_call.1} parent=43 // pred_fallthru
          _
      $region44: #{tpu_custom_call.1} parent=5 // pred_fallthru
        _
    $region6: #{tpu_custom_call.1} parent=1 // loop_footer
      %s36 = sadd.s32 1, %s32
    $region7: #{tpu_custom_call.1} parent=1 // loop_footer_branch
      %31 = sbr.rel target = $region3
    $region8: #{tpu_custom_call.1} parent=1 // loop_exit
      _
    %280 = vsyncpa [#allocation6], 1
    %s281 = scalar_lea.sflag [#allocation6], 1
    %282 = vsyncpa %s281, 1
    %283 = vsyncpa [#allocation9], 1
    %s284 = scalar_lea.sflag [#allocation9], 1
    %285 = vsyncpa %s284, 1
    %286 = vsyncpa [#allocation7], 1
    %s287 = scalar_lea.sflag [#allocation7], 1
    %288 = vsyncpa %s287, 1

</llo_original>
